<compile_context>
chip_gen: v6e
topology: v6e:2x2x1
jax: 0.10.0
libtpu: 0.0.40
codegen_flags: <defaults>
</compile_context>

<pallas_src>
import jax
import jax.numpy as jnp
from jax.experimental import pallas as pl
from jax.experimental.pallas import tpu as pltpu

LANE = 128


def sse_kernel(w_ref, b_ref, x_ref, o_ref):
    # w_ref: (C,) f32 in SMEM; b_ref: (1,) f32 in SMEM
    # x_ref / o_ref: (C, TS, 128) tiles in VMEM (aliased HBM buffers)
    x = x_ref[...]
    xf = x.astype(jnp.float32)
    C = xf.shape[0]

    # 1x1 conv over channels -> one output channel: C scalar-broadcast FMAs on
    # dense (TS, 128) tiles. Static Python unroll; traced once.
    y = xf[0] * w_ref[0]
    for c in range(1, C):
        y = y + xf[c] * w_ref[c]

    s = jax.nn.sigmoid(y + b_ref[0])                 # (TS, 128) on the EUP slot
    o_ref[...] = (xf * s[None, :, :]).astype(o_ref.dtype)


@jax.jit
def sse_forward(x, conv_weight, conv_bias):
    """x: (N, C, H, W); conv_weight: (1, C, 1, 1); conv_bias: (1,)."""
    N, C, H, W = x.shape
    HW = H * W
    itemsize = jnp.dtype(x.dtype).itemsize

    # Rows of 128 lanes; pick a sublane-row tile TS so that the double-buffered
    # input + output tiles (4 live buffers) fit well under the scoped-VMEM
    # default on every TPU generation (budget ~16 MiB, safe even on v7x).
    n_rows = pl.cdiv(HW, LANE)
    budget_bytes = 16 * 1024 * 1024
    ts_cap = budget_bytes // (4 * C * LANE * itemsize)
    ts_cap = max(8, (ts_cap // 8) * 8)
    ts_cap = min(ts_cap, 1024)
    if n_rows <= ts_cap:
        ts = n_rows                       # full axis -> legal even if not a mult of 8
        n_rows_p = n_rows
    else:
        ts = ts_cap                       # multiple of 8
        n_rows_p = pl.cdiv(n_rows, ts) * ts
    hw_p = n_rows_p * LANE

    x3 = x.reshape(N, C, HW)
    if hw_p != HW:                        # pad so every tile is lane-dense (no vst.msk)
        x3 = jnp.pad(x3, ((0, 0), (0, 0), (0, hw_p - HW)))
    x4 = x3.reshape(N, C, n_rows_p, LANE)

    w = conv_weight.reshape(C).astype(jnp.float32)
    b = conv_bias.reshape(1).astype(jnp.float32)

    out4 = pl.pallas_call(
        sse_kernel,
        out_shape=jax.ShapeDtypeStruct((N, C, n_rows_p, LANE), x.dtype),
        grid_spec=pltpu.PrefetchScalarGridSpec(
            num_scalar_prefetch=0,
            grid=(N, n_rows_p // ts),
            in_specs=[
                pl.BlockSpec(memory_space=pltpu.SMEM),                       # weight (C,)
                pl.BlockSpec(memory_space=pltpu.SMEM),                       # bias  (1,)
                pl.BlockSpec((None, C, ts, LANE), lambda n, h: (n, 0, h, 0)),
            ],
            out_specs=pl.BlockSpec((None, C, ts, LANE), lambda n, h: (n, 0, h, 0)),
        ),
        input_output_aliases={2: 0},      # write result in place of (padded) x
        compiler_params=pltpu.CompilerParams(
            dimension_semantics=("parallel", "parallel")),
    )(w, b, x4)

    if hw_p != HW:
        out = out4.reshape(N, C, hw_p)[:, :, :HW]
        return out.reshape(N, C, H, W)
    return out4.reshape(N, C, H, W)


def sse_reference(x, conv_weight, conv_bias):
    # Pure-JAX reference mirroring the PyTorch module.
    w = conv_weight.reshape(1, -1, 1, 1)                       # (1, C, 1, 1)
    y = jnp.sum(x * w, axis=1, keepdims=True) + conv_bias[0]   # (N, 1, H, W)
    return x * jax.nn.sigmoid(y)


if __name__ == "__main__":
    key = jax.random.PRNGKey(0)
    kx, kw, kb = jax.random.split(key, 3)

    N, C, H, W = 2, 4, 16, 16
    x = jax.random.normal(kx, (N, C, H, W), dtype=jnp.float32)

    # Deterministic synthetic Conv2d(in_ch=C, out_ch=1, k=1) parameters.
    fan_in = C  # 1x1 kernel
    bound = 1.0 / (fan_in ** 0.5)
    conv_weight = jax.random.uniform(kw, (1, C, 1, 1), jnp.float32, -bound, bound)
    conv_bias = jax.random.uniform(kb, (1,), jnp.float32, -bound, bound)

    out = sse_forward(x, conv_weight, conv_bias)
    jax.block_until_ready(out)

    ref = sse_reference(x, conv_weight, conv_bias)
    assert out.shape == (N, C, H, W)
    assert jnp.allclose(out, ref, atol=1e-5, rtol=1e-5), "mismatch vs reference"

    # Ragged spatial size exercises the lane-padding path (HW not a mult of 128).
    x2 = jax.random.normal(kx, (N, C, 10, 10), dtype=jnp.float32)
    out2 = sse_forward(x2, conv_weight, conv_bias)
    jax.block_until_ready(out2)
    ref2 = sse_reference(x2, conv_weight, conv_bias)
    assert out2.shape == (N, C, 10, 10)
    assert jnp.allclose(out2, ref2, atol=1e-5, rtol=1e-5), "mismatch vs reference (padded)"

    print("KERNEL_OK")
</pallas_src>

<mosaic_0001>
module attributes {stable_mosaic.version = 11 : i64} {
  func.func @sse_kernel(%arg0: i32, %arg1: i32, %arg2: memref<4xf32, #tpu.memory_space<smem>>, %arg3: memref<1xf32, #tpu.memory_space<smem>>, %arg4: memref<1x4x2x128xf32, #tpu.memory_space<vmem>>, %arg5: memref<1x4x2x128xf32, #tpu.memory_space<vmem>>) attributes {dimension_semantics = [#tpu.dimension_semantics<parallel>, #tpu.dimension_semantics<parallel>], iteration_bounds = array<i64: 2, 1>, scalar_prefetch = 0 : i64, scratch_operands = 0 : i64, tpu.core_type = #tpu.core_type<tc>, window_params = [{transform_indices = @transform_0, window_bounds = array<i64: 4>}, {transform_indices = @transform_1, window_bounds = array<i64: 1>}, {transform_indices = @transform_2, window_bounds = array<i64: 1, 4, 2, 128>}, {transform_indices = @transform_3, window_bounds = array<i64: 1, 4, 2, 128>}]} {
    %c0 = arith.constant 0 : index
    %c0_0 = arith.constant 0 : index
    %c0_1 = arith.constant 0 : index
    %c0_2 = arith.constant 0 : index
    %0 = vector.load %arg4[%c0, %c0_0, %c0_1, %c0_2] : memref<1x4x2x128xf32, #tpu.memory_space<vmem>>, vector<1x4x2x128xf32>
    %1 = vector.shape_cast %0 : vector<1x4x2x128xf32> to vector<4x2x128xf32>
    %2 = vector.extract_strided_slice %1 {offsets = [0, 0, 0], sizes = [1, 2, 128], strides = [1, 1, 1]} : vector<4x2x128xf32> to vector<1x2x128xf32>
    %3 = vector.shape_cast %2 : vector<1x2x128xf32> to vector<2x128xf32>
    %c0_3 = arith.constant 0 : index
    %4 = memref.load %arg2[%c0_3] : memref<4xf32, #tpu.memory_space<smem>>
    %5 = vector.broadcast %4 : f32 to vector<2x128xf32>
    %6 = arith.mulf %3, %5 : vector<2x128xf32>
    %7 = vector.extract_strided_slice %1 {offsets = [1, 0, 0], sizes = [1, 2, 128], strides = [1, 1, 1]} : vector<4x2x128xf32> to vector<1x2x128xf32>
    %8 = vector.shape_cast %7 : vector<1x2x128xf32> to vector<2x128xf32>
    %c1 = arith.constant 1 : index
    %9 = memref.load %arg2[%c1] : memref<4xf32, #tpu.memory_space<smem>>
    %10 = vector.broadcast %9 : f32 to vector<2x128xf32>
    %11 = arith.mulf %8, %10 : vector<2x128xf32>
    %12 = arith.addf %6, %11 : vector<2x128xf32>
    %13 = vector.extract_strided_slice %1 {offsets = [2, 0, 0], sizes = [1, 2, 128], strides = [1, 1, 1]} : vector<4x2x128xf32> to vector<1x2x128xf32>
    %14 = vector.shape_cast %13 : vector<1x2x128xf32> to vector<2x128xf32>
    %c2 = arith.constant 2 : index
    %15 = memref.load %arg2[%c2] : memref<4xf32, #tpu.memory_space<smem>>
    %16 = vector.broadcast %15 : f32 to vector<2x128xf32>
    %17 = arith.mulf %14, %16 : vector<2x128xf32>
    %18 = arith.addf %12, %17 : vector<2x128xf32>
    %19 = vector.extract_strided_slice %1 {offsets = [3, 0, 0], sizes = [1, 2, 128], strides = [1, 1, 1]} : vector<4x2x128xf32> to vector<1x2x128xf32>
    %20 = vector.shape_cast %19 : vector<1x2x128xf32> to vector<2x128xf32>
    %c3 = arith.constant 3 : index
    %21 = memref.load %arg2[%c3] : memref<4xf32, #tpu.memory_space<smem>>
    %22 = vector.broadcast %21 : f32 to vector<2x128xf32>
    %23 = arith.mulf %20, %22 : vector<2x128xf32>
    %24 = arith.addf %18, %23 : vector<2x128xf32>
    %c0_4 = arith.constant 0 : index
    %25 = memref.load %arg3[%c0_4] : memref<1xf32, #tpu.memory_space<smem>>
    %26 = vector.broadcast %25 : f32 to vector<2x128xf32>
    %27 = arith.addf %24, %26 : vector<2x128xf32>
    %28 = arith.negf %27 : vector<2x128xf32>
    %29 = math.exp %28 : vector<2x128xf32>
    %cst = arith.constant 1.000000e+00 : f32
    %30 = vector.broadcast %cst : f32 to vector<2x128xf32>
    %31 = arith.addf %30, %29 : vector<2x128xf32>
    %32 = arith.divf %30, %31 : vector<2x128xf32>
    %33 = vector.shape_cast %32 : vector<2x128xf32> to vector<1x2x128xf32>
    %34 = vector.broadcast %33 : vector<1x2x128xf32> to vector<4x2x128xf32>
    %35 = arith.mulf %1, %34 : vector<4x2x128xf32>
    %c0_5 = arith.constant 0 : index
    %c0_6 = arith.constant 0 : index
    %c0_7 = arith.constant 0 : index
    %c0_8 = arith.constant 0 : index
    %36 = vector.load %arg5[%c0_5, %c0_6, %c0_7, %c0_8] : memref<1x4x2x128xf32, #tpu.memory_space<vmem>>, vector<1x4x2x128xf32>
    %37 = vector.shape_cast %36 : vector<1x4x2x128xf32> to vector<4x2x128xf32>
    %38 = vector.shape_cast %35 : vector<4x2x128xf32> to vector<1x4x2x128xf32>
    tpu.vector_store %arg5[%c0_5, %c0_6, %c0_7, %c0_8], %38 {strides = array<i32>} : memref<1x4x2x128xf32, #tpu.memory_space<vmem>>, vector<1x4x2x128xf32>,
    return
  }
  func.func @transform_0(%arg0: i32, %arg1: i32) -> i32 {
    %c0_i32 = arith.constant 0 : i32
    %c0_i32_0 = arith.constant 0 : i32
    return %c0_i32 : i32
  }
  func.func @transform_1(%arg0: i32, %arg1: i32) -> i32 {
    %c0_i32 = arith.constant 0 : i32
    %c0_i32_0 = arith.constant 0 : i32
    return %c0_i32 : i32
  }
  func.func @transform_2(%arg0: i32, %arg1: i32) -> (i32, i32, i32, i32) {
    %c0_i32 = arith.constant 0 : i32
    %c0_i32_0 = arith.constant 0 : i32
    %c0_i32_1 = arith.constant 0 : i32
    return %arg0, %c0_i32, %arg1, %c0_i32_0 : i32, i32, i32, i32
  }
  func.func @transform_3(%arg0: i32, %arg1: i32) -> (i32, i32, i32, i32) {
    %c0_i32 = arith.constant 0 : i32
    %c0_i32_0 = arith.constant 0 : i32
    %c0_i32_1 = arith.constant 0 : i32
    return %arg0, %c0_i32, %arg1, %c0_i32_0 : i32, i32, i32, i32
  }
}

</mosaic_0001>

<llo_original>
// kernel: sse_forward.1
$region0: #{sse_forward.1}
  #allocation0 [shape = 'u32[]', space=smem, size = 0x4, offset = 0x4, fixed_abs, tag = 'smem constant byte address 0x4 - core index']
  #allocation1 [shape = 'u32[144,128]{1,0:T(1,128)}', space=vmem, size = 0x12000, scoped, tag = 'internal scratch']
  #allocation2 [shape = 'f32[1]{0:T(128)S(6)}', space=smem, size = 0x200, scoped, tag = 'scoped memory for sse_forward.1']
  %s0 = inlined_call_operand.vmem [shape: f32[4], index: 0, kind: input, shape index: {}]
  %s1 = inlined_call_operand.<no memory space> [shape: f32[1], index: 1, kind: input, shape index: {}]
  %s2 = inlined_call_operand.vmem [shape: f32[2,4,2,128], index: 2, kind: input, shape index: {}, may-alias: {2,3}]
  %s3 = inlined_call_operand.vmem [shape: f32[2,4,2,128], index: 3, kind: output, shape index: {}, may-alias: {2,3}]
  %s4 = sld [smem:[#allocation0]]
  $region49: #{sse_forward.1} parent=0
    _
  %s6 = ssub.s32 1, %s4
  %s7 = scalar_select 0, %s6, %s4
  %8 = sst [smem:[#allocation2]] %s1
  $region1: #{sse_forward.1} parent=0
    #allocation3 [shape = 'u8[512]{0}', space=smem, size = 0x200, scoped, tag = 'input window, operand 0, single buffered']
    #allocation4 [shape = 's32[2]{0}', space=sflag, size = 0x8, scoped, tag = 'scoped memory for sse_forward.1']
    %9 = vsyncpa [#allocation4], 0
    loop: start=0, step=1, limit=4
    $region2: #{sse_forward.1} parent=1 // loop_pre_header
      _
    $region3: #{sse_forward.1} parent=1 // loop_header
      %s11 = sphi 0, %s15
      %p12 = scmp.ge.s32.totalorder %s11, 4
      %s18 = sphi 0, %s30
      %s19 = sphi 0, %s26
      %s20 = sphi 0, %s18
      %s21 = sphi 0, %s19
      %s22 = sphi 0, %s20
      %s23 = sphi 0, %s21
      %s31 = sphi 0, %s31
      %s33 = sphi 0, %s31
      %s34 = sphi 0, %s33
      %s48 = sphi 0, %s34
      %s52 = sphi 0, %s52
      %s54 = sphi 0, %s52
      %s55 = sphi 0, %s54
      %s69 = sphi 0, %s55
      %s77 = sphi 0, %s79
      %s80 = sphi 0, %s77
      %s81 = sphi 0, %s80
      %s97 = sphi 0, %s81
      %s105 = sphi 0, %s107
      %s108 = sphi 0, %s105
      %s109 = sphi 0, %s108
      %s125 = sphi 0, %s109
    $region4: #{sse_forward.1} parent=1 // loop_header_branch
      %14 = sbr.rel (%p12) target = $region8
    $region5: #{sse_forward.1} parent=1 // loop_body
      %s16 = ssub.s32 %s11, 1
      %s17 = ssub.s32 %s11, 2
      %s24 = sadd.s32 1, %s19
      %p25 = scmp.ge.s32.totalorder %s24, 1
      %s26 = scalar_select %p25, 0, %s24
      %s27 = sadd.s32 1, %s18
      %s28 = scalar_select %p25, %s27, %s18
      %p29 = scmp.ge.s32.totalorder %s28, 2
      %s30 = scalar_select %p29, 0, %s28
      %s32 = sadd.s32 %s31, 1
      %p35 = scmp.eq.s32.totalorder %s11, 1
      %p36 = scmp.ne.s32.totalorder %s31, %s33
      %p37 = scmp.eq.s32.totalorder %s11, 0
      %p38 = por %p36, %p37
      %p39 = scmp.ne.s32.totalorder %s31, %s33
      %p40 = scmp.eq.s32.totalorder %s16, 1
      %p41 = por %p39, %p40
      %p42 = scmp.ne.s32.totalorder %s33, %s34
      %p43 = scmp.eq.s32.totalorder %s16, 0
      %p44 = por %p42, %p43
      %p45 = scmp.ne.s32.totalorder %s33, %s34
      %p46 = scmp.eq.s32.totalorder %s17, 1
      %p47 = por %p45, %p46
      %p49 = scmp.ne.s32.totalorder %s34, %s48
      %p50 = scmp.eq.s32.totalorder %s17, 0
      %p51 = por %p49, %p50
      %s53 = sadd.s32 %s52, 1
      %p56 = scmp.eq.s32.totalorder %s11, 1
      %p57 = scmp.ne.s32.totalorder %s52, %s54
      %p58 = scmp.eq.s32.totalorder %s11, 0
      %p59 = por %p57, %p58
      %p60 = scmp.ne.s32.totalorder %s52, %s54
      %p61 = scmp.eq.s32.totalorder %s16, 1
      %p62 = por %p60, %p61
      %p63 = scmp.ne.s32.totalorder %s54, %s55
      %p64 = scmp.eq.s32.totalorder %s16, 0
      %p65 = por %p63, %p64
      %p66 = scmp.ne.s32.totalorder %s54, %s55
      %p67 = scmp.eq.s32.totalorder %s17, 1
      %p68 = por %p66, %p67
      %p70 = scmp.ne.s32.totalorder %s55, %s69
      %p71 = scmp.eq.s32.totalorder %s17, 0
      %p72 = por %p70, %p71
      %s73 = ssub.s32 %s18, %s30
      %s74 = ssub.s32 %s19, %s26
      %s75 = sor.u32 %s73, %s74
      %p76 = scmp.eq.s32.totalorder %s75, 0
      %s78 = sadd.s32 %s77, 1
      %s79 = scalar_select %p76, %s77, %s78
      %p82 = pneg %p76
      %p83 = scmp.eq.s32.totalorder %s11, 1
      %p84 = por %p82, %p83
      %p85 = scmp.ne.s32.totalorder %s77, %s80
      %p86 = scmp.eq.s32.totalorder %s11, 0
      %p87 = por %p85, %p86
      %p88 = scmp.ne.s32.totalorder %s77, %s80
      %p89 = scmp.eq.s32.totalorder %s16, 1
      %p90 = por %p88, %p89
      %p91 = scmp.ne.s32.totalorder %s80, %s81
      %p92 = scmp.eq.s32.totalorder %s16, 0
      %p93 = por %p91, %p92
      %p94 = scmp.ne.s32.totalorder %s80, %s81
      %p95 = scmp.eq.s32.totalorder %s17, 1
      %p96 = por %p94, %p95
      %p98 = scmp.ne.s32.totalorder %s81, %s97
      %p99 = scmp.eq.s32.totalorder %s17, 0
      %p100 = por %p98, %p99
      %s101 = ssub.s32 %s18, %s30
      %s102 = ssub.s32 %s19, %s26
      %s103 = sor.u32 %s101, %s102
      %p104 = scmp.eq.s32.totalorder %s103, 0
      %s106 = sadd.s32 %s105, 1
      %s107 = scalar_select %p104, %s105, %s106
      %p110 = pneg %p104
      %p111 = scmp.eq.s32.totalorder %s11, 1
      %p112 = por %p110, %p111
      %p113 = scmp.ne.s32.totalorder %s105, %s108
      %p114 = scmp.eq.s32.totalorder %s11, 0
      %p115 = por %p113, %p114
      %p116 = scmp.ne.s32.totalorder %s105, %s108
      %p117 = scmp.eq.s32.totalorder %s16, 1
      %p118 = por %p116, %p117
      %p119 = scmp.ne.s32.totalorder %s108, %s109
      %p120 = scmp.eq.s32.totalorder %s16, 0
      %p121 = por %p119, %p120
      %p122 = scmp.ne.s32.totalorder %s108, %s109
      %p123 = scmp.eq.s32.totalorder %s17, 1
      %p124 = por %p122, %p123
      %p126 = scmp.ne.s32.totalorder %s109, %s125
      %p127 = scmp.eq.s32.totalorder %s17, 0
      %p128 = por %p126, %p127
      %p129 = scmp.le.s32.totalorder 1, %s11
      %p130 = scmp.lt.s32.totalorder %s11, 3
      %p131 = pnand %p129, %p130
      %p132 = pneg %p131
      // Predicated region
      $region9: #{sse_forward.1} parent=5 // pred_check
        _
      $region10: #{sse_forward.1} parent=5 // pred_check_branch
        %134 = sbr.rel (%p131) target = $region12
      $region11: #{sse_forward.1} parent=5 // pred_region
        %s135 = ssub.s32 %s11, 1
        // Predicated region
        $region13: #{sse_forward.1} parent=11 // pred_check
          %p136 = pneg %p44
        $region14: #{sse_forward.1} parent=11 // pred_check_branch
          %138 = sbr.rel (%p136) target = $region16
        $region15: #{sse_forward.1} parent=11 // pred_region
          %s140 = ssub.s32 16, 16
          %141 = vsyncadd [#allocation4], %s140
          %s143 = sshll.u32 %s0, 4
          %s144 = int_to_ptr.vmem [resolvable:$true] %s143
          %146 = dma.vmem_to_smem %s144, 16, [#allocation3], [#allocation4]
        $region16: #{sse_forward.1} parent=11 // pred_fallthru
          _
        // Predicated region
        $region17: #{sse_forward.1} parent=11 // pred_check
          %p147 = pneg %p65
        $region18: #{sse_forward.1} parent=11 // pred_check_branch
          %149 = sbr.rel (%p147) target = $region20
        $region19: #{sse_forward.1} parent=11 // pred_region
          _
        $region20: #{sse_forward.1} parent=11 // pred_fallthru
          _
      $region12: #{sse_forward.1} parent=5 // pred_fallthru
        _
      %p150 = scmp.lt.s32.totalorder %s11, 2
      // Predicated region
      $region21: #{sse_forward.1} parent=5 // pred_check
        %p151 = pneg %p150
      $region22: #{sse_forward.1} parent=5 // pred_check_branch
        %153 = sbr.rel (%p151) target = $region24
      $region23: #{sse_forward.1} parent=5 // pred_region
        // Predicated region
        $region25: #{sse_forward.1} parent=23 // pred_check
          %p154 = pneg %p87
        $region26: #{sse_forward.1} parent=23 // pred_check_branch
          %156 = sbr.rel (%p154) target = $region28
        $region27: #{sse_forward.1} parent=23 // pred_region
          %p157 = scmp.lt.s32.totalorder %s18, 1
          %s158 = scalar_select %p157, %s18, 1
          %p159 = scmp.lt.s32.totalorder %s19, 0
          %s160 = scalar_select %p159, %s19, 0
          %s161 = smul.addr %s158, 4
          %s162 = sadd.s32 %s160, %s161
          %s163 = smul.addr %s162, 2
          %s164 = scalar_lea.vmem %s2, %s163
        $region28: #{sse_forward.1} parent=23 // pred_fallthru
          _
      $region24: #{sse_forward.1} parent=5 // pred_fallthru
        _
      %p165 = scmp.le.s32.totalorder 1, %s11
      %p166 = scmp.lt.s32.totalorder %s11, 3
      %p167 = pnand %p165, %p166
      %p168 = pneg %p167
      // Predicated region
      $region29: #{sse_forward.1} parent=5 // pred_check
        _
      $region30: #{sse_forward.1} parent=5 // pred_check_branch
        %170 = sbr.rel (%p167) target = $region32
      $region31: #{sse_forward.1} parent=5 // pred_region
        %s171 = ssub.s32 %s11, 1
        // Predicated region
        $region33: #{sse_forward.1} parent=31 // pred_check
          %p172 = pneg %p44
        $region34: #{sse_forward.1} parent=31 // pred_check_branch
          %174 = sbr.rel (%p172) target = $region36
        $region35: #{sse_forward.1} parent=31 // pred_region
          %175 = dma.done [#allocation4], 16
        $region36: #{sse_forward.1} parent=31 // pred_fallthru
          _
        %176 = sfence
        %p177 = pneg %p44
        %p178 = pneg %p41
        %p179 = pneg %p65
        %p180 = pneg %p62
        %p181 = scmp.lt.s32.totalorder %s20, 1
        %s182 = scalar_select %p181, %s20, 1
        %p183 = scmp.lt.s32.totalorder %s21, 0
        %s184 = scalar_select %p183, %s21, 0
        %s185 = smul.addr %s182, 4
        %s186 = sadd.s32 %s184, %s185
        %s187 = smul.addr %s186, 2
        %s188 = scalar_lea.vmem %s2, %s187
        %p189 = pneg %p93
        %p190 = pneg %p90
        %p191 = pneg %p121
        %p192 = pneg %p118
        %p193 = scmp.lt.s32.totalorder %s20, 1
        %s194 = scalar_select %p193, %s20, 1
        %p195 = scmp.lt.s32.totalorder %s21, 0
        %s196 = scalar_select %p195, %s21, 0
        %s197 = smul.addr %s194, 4
        %s198 = sadd.s32 %s196, %s197
        %s199 = smul.addr %s198, 2
        %s200 = scalar_lea.vmem %s3, %s199
        %p201 = scmp.lt.s32.totalorder %s20, 1
        %s202 = scalar_select %p201, %s20, 1
        %p203 = scmp.lt.s32.totalorder %s21, 0
        %s204 = scalar_select %p203, %s21, 0
        %s205 = smul.addr %s202, 4
        %s206 = sadd.s32 %s204, %s205
        %s207 = smul.addr %s206, 2
        %s208 = scalar_lea.vmem %s2, %s207
        %p209 = scmp.lt.s32.totalorder %s20, 1
        %s210 = scalar_select %p209, %s20, 1
        %p211 = scmp.lt.s32.totalorder %s21, 0
        %s212 = scalar_select %p211, %s21, 0
        %s213 = smul.addr %s210, 4
        %s214 = sadd.s32 %s212, %s213
        %s215 = smul.addr %s214, 2
        %s216 = scalar_lea.vmem %s3, %s215
        %v217 = vld [vmem:[%s208] sm:$0x3]
        %v218 = vld [vmem:[%s208 + $0x2] sm:$0x3]
        %v219 = vld [vmem:[%s208 + $0x4] sm:$0x3]
        %v220 = vld [vmem:[%s208 + $0x6] sm:$0x3]
        %s221 = sld [smem:[#allocation3]]
        %v222 = vstv %s221
        %v223 = vmul.f32 %v217, %v222
        %s224 = sld [smem:[#allocation3 + $0x1]]
        %v225 = vstv %s224
        %v226 = vmul.f32 %v218, %v225
        %v227 = vadd.f32 %v223, %v226
        %s228 = sld [smem:[#allocation3 + $0x2]]
        %v229 = vstv %s228
        %v230 = vmul.f32 %v219, %v229
        %v231 = vadd.f32 %v227, %v230
        %s232 = sld [smem:[#allocation3 + $0x3]]
        %v233 = vstv %s232
        %v234 = vmul.f32 %v220, %v233
        %v235 = vadd.f32 %v231, %v234
        %s236 = sld [smem:[#allocation2]]
        %v237 = vstv %s236
        %v238 = vadd.f32 %v235, %v237
        %v239 = vxor.u32 %v238, 2147483648
        %v240 = vmul.f32 %v239, 1.442695
        %v241 = vpow.pop %v240
        %v242 = vadd.f32 %v241, 1.0
        %v243 = vrcp.pop %v242
        %v244 = vmul.f32 1.0, %v243
        %v245 = vmul.f32 %v217, %v244
        %v246 = vmul.f32 %v218, %v244
        %v247 = vmul.f32 %v219, %v244
        %v248 = vmul.f32 %v220, %v244
        %249 = vst [vmem:[%s216] sm:$0x3] %v245
        %250 = vst [vmem:[%s216 + $0x2] sm:$0x3] %v246
        %251 = vst [vmem:[%s216 + $0x4] sm:$0x3] %v247
        %252 = vst [vmem:[%s216 + $0x6] sm:$0x3] %v248
        %p253 = scmp.lt.s32.totalorder %s20, 1
        %s254 = scalar_select %p253, %s20, 1
        %p255 = scmp.lt.s32.totalorder %s21, 0
        %s256 = scalar_select %p255, %s21, 0
        %s257 = smul.addr %s254, 4
        %s258 = sadd.s32 %s256, %s257
        %s259 = smul.addr %s258, 2
        %s260 = scalar_lea.vmem %s3, %s259
        // Predicated region
        $region37: #{sse_forward.1} parent=31 // pred_check
          %p261 = pneg %p118
        $region38: #{sse_forward.1} parent=31 // pred_check_branch
          %263 = sbr.rel (%p261) target = $region40
        $region39: #{sse_forward.1} parent=31 // pred_region
          _
        $region40: #{sse_forward.1} parent=31 // pred_fallthru
          _
      $region32: #{sse_forward.1} parent=5 // pred_fallthru
        _
      %p264 = scmp.le.s32.totalorder 2, %s11
      // Predicated region
      $region41: #{sse_forward.1} parent=5 // pred_check
        %p265 = pneg %p264
      $region42: #{sse_forward.1} parent=5 // pred_check_branch
        %267 = sbr.rel (%p265) target = $region44
      $region43: #{sse_forward.1} parent=5 // pred_region
        %s268 = ssub.s32 %s11, 2
        // Predicated region
        $region45: #{sse_forward.1} parent=43 // pred_check
          %p269 = pneg %p124
        $region46: #{sse_forward.1} parent=43 // pred_check_branch
          %271 = sbr.rel (%p269) target = $region48
        $region47: #{sse_forward.1} parent=43 // pred_region
          %p272 = scmp.lt.s32.totalorder %s22, 1
          %s273 = scalar_select %p272, %s22, 1
          %p274 = scmp.lt.s32.totalorder %s23, 0
          %s275 = scalar_select %p274, %s23, 0
          %s276 = smul.addr %s273, 4
          %s277 = sadd.s32 %s275, %s276
          %s278 = smul.addr %s277, 2
          %s279 = scalar_lea.vmem %s3, %s278
        $region48: #{sse_forward.1} parent=43 // pred_fallthru
          _
      $region44: #{sse_forward.1} parent=5 // pred_fallthru
        _
    $region6: #{sse_forward.1} parent=1 // loop_footer
      %s15 = sadd.s32 1, %s11
    $region7: #{sse_forward.1} parent=1 // loop_footer_branch
      %10 = sbr.rel target = $region3
    $region8: #{sse_forward.1} parent=1 // loop_exit
      _
    %280 = vsyncpa [#allocation4], 1
    %s281 = scalar_lea.sflag [#allocation4], 1
    %282 = vsyncpa %s281, 1

</llo_original>
